<compile_context>
chip_gen: v6e
topology: v6e:2x2x1
jax: 0.10.0
libtpu: 0.0.40
codegen_flags: <defaults>
</compile_context>

<pallas_src>
import math

import jax
import jax.numpy as jnp
from jax.experimental import pallas as pl
from jax.experimental.pallas import tpu as pltpu


_SQRT_2_OVER_PI = math.sqrt(2.0 / math.pi)


def _gelu_tanh(x):
    # tanh-approximation GELU (PyTorch nn.GELU() default is the erf form;
    # the tanh form matches it to ~1e-3 and lowers to the EUP tanh unit).
    return 0.5 * x * (1.0 + jnp.tanh(_SQRT_2_OVER_PI * (x + 0.044715 * x * x * x)))


def _ffn_kernel(x_ref, w1_ref, b1_ref, w2_ref, b2_ref, o_ref):
    # x_ref : [tm, Hp]   one row-tile of the flattened input (I/O dtype)
    # w1_ref: [Hp, Hp]   bf16, pre-transposed to [in, out] = [K, N]
    # b1_ref: [1,  Hp]   f32
    # w2_ref: [Hp, Hp]   bf16, pre-transposed AND pre-scaled by 0.5
    #                    (GELU's 0.5 factor folded into W2 in the wrapper)
    # b2_ref: [1,  Hp]   f32
    # o_ref : [tm, Hp]   I/O dtype
    cdt = w1_ref.dtype

    # First 1x1 conv (linear): bf16 operands, f32 MXU accumulation.
    h = jnp.dot(x_ref[...].astype(cdt), w1_ref[...],
                preferred_element_type=jnp.float32)
    h = h + b1_ref[...]

    # GELU (tanh approx) WITHOUT the leading 0.5 -- that constant is folded
    # into W2 on the wrapper side, saving one VPU multiply per element.
    g = h * (1.0 + jnp.tanh(_SQRT_2_OVER_PI * (h + 0.044715 * (h * h * h))))

    # Second 1x1 conv; the intermediate `g` never leaves VMEM/vregs.
    y = jnp.dot(g.astype(cdt), w2_ref[...], preferred_element_type=jnp.float32)
    y = y + b2_ref[...]

    # Residual: re-read x from the VMEM input buffer (keeps the [tm, Hp] x
    # value's live range short across both matmuls -> less vreg pressure).
    o_ref[...] = (x_ref[...].astype(jnp.float32) + y).astype(o_ref.dtype)

    # TODO(synk): training-mode dropout would need in-kernel PRNG
    # (pltpu.prng_seed / pltpu.prng_random_bits); eval-mode is identity.


def _round_up(v, m):
    return ((v + m - 1) // m) * m


def pointwise_ffn_forward(x, w1, b1, w2, b2, *, tm_max=512,
                          compute_dtype=jnp.bfloat16):
    """Fused SASRec PointWiseFeedForward forward pass (dropout = identity).

    x      : [..., H]
    w1, w2 : [H, H]   (Conv1d 1x1 weights with trailing kernel axis squeezed:
                       weight[out_ch, in_ch])
    b1, b2 : [H]
    returns  x + GELU(x @ w1.T + b1) @ w2.T + b2
    """
    orig_dtype = x.dtype
    h_dim = x.shape[-1]
    lead_shape = x.shape[:-1]
    m = 1
    for d in lead_shape:
        m *= d

    # Lane-dense hidden size (multiple of 128).
    hp = _round_up(max(h_dim, 128), 128)

    # ---- VMEM gate ---------------------------------------------------------
    w_itemsize = jnp.dtype(compute_dtype).itemsize
    io_itemsize = jnp.dtype(orig_dtype).itemsize
    weight_bytes = 2 * hp * hp * w_itemsize          # W1^T + W2^T, single-buffered
    if weight_bytes > 48 * (1 << 20):
        # TODO(synk): tile the weights over the output dim (extra 'arbitrary'
        # grid axes) for very large hidden sizes instead of this XLA fallback.
        h1 = _gelu_tanh(jnp.dot(x, w1.T) + b1)
        return (x + jnp.dot(h1, w2.T) + b2).astype(orig_dtype)

    # ---- Row tiling --------------------------------------------------------
    # Round rows to 16 (bf16 sublane packing).  Prefer >= 2 grid steps so the
    # "parallel" row axis feeds both v7x TensorCores, and honour a VMEM
    # budget so x/out double buffers + resident weights fit comfortably.
    row_align = 16
    mp_min = _round_up(m, row_align)
    tm = min(tm_max, mp_min)
    if tm == mp_min and tm >= 2 * row_align:
        tm = _round_up((mp_min + 1) // 2, row_align)   # split into >= 2 tiles

    vmem_budget = 56 * (1 << 20)

    def _vmem_need(tm_):
        act = 2 * tm_ * hp * io_itemsize * 2           # x + out, double-buffered
        bias = 2 * 8 * hp * 4                          # (1,Hp) f32 pads to 8 sublanes
        return weight_bytes + bias + act

    while tm > 2 * row_align and _vmem_need(tm) > vmem_budget:
        tm = _round_up(tm // 2, row_align)

    mp = _round_up(m, tm)
    vmem_limit = int(min(60 * (1 << 20),
                         max(_vmem_need(tm) * 5 // 4 + (2 << 20), 16 << 20)))

    # ---- Layout prep (wrapper side, amortized over the whole call) ---------
    pad_rows = mp - m
    pad_cols = hp - h_dim

    w1_t = jnp.transpose(w1).astype(compute_dtype)            # [in, out]
    # Fold GELU's 0.5 into W2 (exact: power-of-two scale, applied pre-cast).
    w2_t = (jnp.transpose(w2) * 0.5).astype(compute_dtype)
    b1_f = b1.astype(jnp.float32)
    b2_f = b2.astype(jnp.float32)

    x2d = x.reshape(m, h_dim)
    if pad_rows or pad_cols:                # skip the extra HBM pass if aligned
        x2d = jnp.pad(x2d, ((0, pad_rows), (0, pad_cols)))
    if pad_cols:
        w1_t = jnp.pad(w1_t, ((0, pad_cols), (0, pad_cols)))
        w2_t = jnp.pad(w2_t, ((0, pad_cols), (0, pad_cols)))
        b1_f = jnp.pad(b1_f, (0, pad_cols))
        b2_f = jnp.pad(b2_f, (0, pad_cols))
    b1_f = b1_f.reshape(1, hp)
    b2_f = b2_f.reshape(1, hp)

    grid = (mp // tm,)

    out = pl.pallas_call(
        _ffn_kernel,
        out_shape=jax.ShapeDtypeStruct((mp, hp), orig_dtype),
        grid_spec=pl.GridSpec(
            grid=grid,
            in_specs=[
                # x row tile (double-buffered by default).
                pl.BlockSpec((tm, hp), lambda i: (i, 0)),
                # Constant-index weights/biases: single-buffered -> half the
                # resident weight VMEM (Pallas skips re-DMA anyway).
                pl.BlockSpec((hp, hp), lambda i: (0, 0),
                             pipeline_mode=pl.Buffered(1)),
                pl.BlockSpec((1, hp), lambda i: (0, 0),
                             pipeline_mode=pl.Buffered(1)),
                pl.BlockSpec((hp, hp), lambda i: (0, 0),
                             pipeline_mode=pl.Buffered(1)),
                pl.BlockSpec((1, hp), lambda i: (0, 0),
                             pipeline_mode=pl.Buffered(1)),
            ],
            out_specs=pl.BlockSpec((tm, hp), lambda i: (i, 0)),
        ),
        compiler_params=pltpu.CompilerParams(
            # Row tiles are independent: shard them across TensorCores
            # (megacore on v7x); no reduction axis is exposed to the grid.
            dimension_semantics=("parallel",),
            vmem_limit_bytes=vmem_limit,
        ),
    )(x2d, w1_t, b1_f, w2_t, b2_f)

    if pad_rows or pad_cols:
        out = out[:m, :h_dim]
    return out.reshape(*lead_shape, h_dim)


def init_ffn_params(key, hidden_units, dtype=jnp.float32):
    """Mirrors PointWiseFeedForward.__init__:
    conv weights: xavier_uniform_; conv biases: PyTorch Conv1d default
    uniform(-1/sqrt(fan_in), 1/sqrt(fan_in)) with fan_in = hidden_units."""
    k1, k2, k3, k4 = jax.random.split(key, 4)
    bound_w = math.sqrt(6.0 / (hidden_units + hidden_units))   # xavier uniform
    w1 = jax.random.uniform(k1, (hidden_units, hidden_units), dtype,
                            -bound_w, bound_w)
    w2 = jax.random.uniform(k2, (hidden_units, hidden_units), dtype,
                            -bound_w, bound_w)
    bound_b = 1.0 / math.sqrt(hidden_units)
    b1 = jax.random.uniform(k3, (hidden_units,), dtype, -bound_b, bound_b)
    b2 = jax.random.uniform(k4, (hidden_units,), dtype, -bound_b, bound_b)
    return w1, b1, w2, b2


if __name__ == "__main__":
    key = jax.random.PRNGKey(0)
    k_x, k_p = jax.random.split(key)

    batch, seq, hidden = 2, 8, 32
    x = jax.random.normal(k_x, (batch, seq, hidden), jnp.float32)
    w1, b1, w2, b2 = init_ffn_params(k_p, hidden)

    # Dropout is the identity at p=0 / eval, so forward == fused FFN below.
    y = pointwise_ffn_forward(x, w1, b1, w2, b2)
    y = jax.block_until_ready(y)

    # Pure-JAX f32 reference (same tanh-approx GELU, dropout = identity).
    hi = jnp.dot(x, w1.T, precision=jax.lax.Precision.HIGHEST) + b1
    ref = x + jnp.dot(_gelu_tanh(hi), w2.T,
                      precision=jax.lax.Precision.HIGHEST) + b2

    assert y.shape == x.shape
    # Tolerance reflects bf16 MXU matmuls (f32 accumulation) vs f32 reference.
    max_err = float(jnp.max(jnp.abs(y - ref)))
    assert jnp.allclose(y, ref, atol=3e-2, rtol=3e-2), max_err

    print("KERNEL_OK")
</pallas_src>

<mosaic_0001>
module attributes {stable_mosaic.version = 11 : i64} {
  func.func @_ffn_kernel(%arg0: i32, %arg1: memref<16x128xf32, #tpu.memory_space<vmem>>, %arg2: memref<128x128xbf16, #tpu.memory_space<vmem>>, %arg3: memref<1x128xf32, #tpu.memory_space<vmem>>, %arg4: memref<128x128xbf16, #tpu.memory_space<vmem>>, %arg5: memref<1x128xf32, #tpu.memory_space<vmem>>, %arg6: memref<16x128xf32, #tpu.memory_space<vmem>>) attributes {dimension_semantics = [#tpu.dimension_semantics<parallel>], iteration_bounds = array<i64: 1>, scalar_prefetch = 0 : i64, scratch_operands = 0 : i64, tpu.core_type = #tpu.core_type<tc>, window_params = [{transform_indices = @transform_0, window_bounds = array<i64: 16, 128>}, {pipeline_mode = #tpu.pipeline_mode<synchronous>, transform_indices = @transform_1, window_bounds = array<i64: 128, 128>}, {pipeline_mode = #tpu.pipeline_mode<synchronous>, transform_indices = @transform_2, window_bounds = array<i64: 1, 128>}, {pipeline_mode = #tpu.pipeline_mode<synchronous>, transform_indices = @transform_3, window_bounds = array<i64: 128, 128>}, {pipeline_mode = #tpu.pipeline_mode<synchronous>, transform_indices = @transform_4, window_bounds = array<i64: 1, 128>}, {transform_indices = @transform_5, window_bounds = array<i64: 16, 128>}]} {
    %c0 = arith.constant 0 : index
    %c0_0 = arith.constant 0 : index
    %0 = vector.load %arg1[%c0, %c0_0] : memref<16x128xf32, #tpu.memory_space<vmem>>, vector<16x128xf32>
    %1 = arith.truncf %0 : vector<16x128xf32> to vector<16x128xbf16>
    %c0_1 = arith.constant 0 : index
    %c0_2 = arith.constant 0 : index
    %2 = vector.load %arg2[%c0_1, %c0_2] : memref<128x128xbf16, #tpu.memory_space<vmem>>, vector<128x128xbf16>
    %cst = arith.constant dense<0.000000e+00> : vector<16x128xf32>
    %3 = tpu.matmul %1, %2, %cst {dimension_numbers = #tpu.dot_dimension_numbers<[1], [0], [0], [1], [0, 0, 1, 1], [], []>} : vector<16x128xbf16>, vector<128x128xbf16>, vector<16x128xf32> -> vector<16x128xf32>
    %c0_3 = arith.constant 0 : index
    %c0_4 = arith.constant 0 : index
    %4 = vector.load %arg3[%c0_3, %c0_4] : memref<1x128xf32, #tpu.memory_space<vmem>>, vector<1x128xf32>
    %5 = vector.broadcast %4 : vector<1x128xf32> to vector<16x128xf32>
    %6 = arith.addf %3, %5 : vector<16x128xf32>
    %7 = arith.mulf %6, %6 : vector<16x128xf32>
    %8 = arith.mulf %7, %6 : vector<16x128xf32>
    %cst_5 = arith.constant 4.471500e-02 : f32
    %9 = vector.broadcast %cst_5 : f32 to vector<16x128xf32>
    %10 = arith.mulf %9, %8 : vector<16x128xf32>
    %11 = arith.addf %6, %10 : vector<16x128xf32>
    %cst_6 = arith.constant 0.797884583 : f32
    %12 = vector.broadcast %cst_6 : f32 to vector<16x128xf32>
    %13 = arith.mulf %12, %11 : vector<16x128xf32>
    %14 = math.tanh %13 : vector<16x128xf32>
    %cst_7 = arith.constant 1.000000e+00 : f32
    %15 = vector.broadcast %cst_7 : f32 to vector<16x128xf32>
    %16 = arith.addf %15, %14 : vector<16x128xf32>
    %17 = arith.mulf %6, %16 : vector<16x128xf32>
    %18 = arith.truncf %17 : vector<16x128xf32> to vector<16x128xbf16>
    %c0_8 = arith.constant 0 : index
    %c0_9 = arith.constant 0 : index
    %19 = vector.load %arg4[%c0_8, %c0_9] : memref<128x128xbf16, #tpu.memory_space<vmem>>, vector<128x128xbf16>
    %cst_10 = arith.constant dense<0.000000e+00> : vector<16x128xf32>
    %20 = tpu.matmul %18, %19, %cst_10 {dimension_numbers = #tpu.dot_dimension_numbers<[1], [0], [0], [1], [0, 0, 1, 1], [], []>} : vector<16x128xbf16>, vector<128x128xbf16>, vector<16x128xf32> -> vector<16x128xf32>
    %c0_11 = arith.constant 0 : index
    %c0_12 = arith.constant 0 : index
    %21 = vector.load %arg5[%c0_11, %c0_12] : memref<1x128xf32, #tpu.memory_space<vmem>>, vector<1x128xf32>
    %22 = vector.broadcast %21 : vector<1x128xf32> to vector<16x128xf32>
    %23 = arith.addf %20, %22 : vector<16x128xf32>
    %c0_13 = arith.constant 0 : index
    %c0_14 = arith.constant 0 : index
    %24 = vector.load %arg1[%c0_13, %c0_14] : memref<16x128xf32, #tpu.memory_space<vmem>>, vector<16x128xf32>
    %25 = arith.addf %24, %23 : vector<16x128xf32>
    %c0_15 = arith.constant 0 : index
    %c0_16 = arith.constant 0 : index
    %26 = vector.load %arg6[%c0_15, %c0_16] : memref<16x128xf32, #tpu.memory_space<vmem>>, vector<16x128xf32>
    tpu.vector_store %arg6[%c0_15, %c0_16], %25 {strides = array<i32>} : memref<16x128xf32, #tpu.memory_space<vmem>>, vector<16x128xf32>,
    return
  }
  func.func @transform_0(%arg0: i32) -> (i32, i32) {
    %c0_i32 = arith.constant 0 : i32
    %c0_i32_0 = arith.constant 0 : i32
    return %arg0, %c0_i32 : i32, i32
  }
  func.func @transform_1(%arg0: i32) -> (i32, i32) {
    %c0_i32 = arith.constant 0 : i32
    %c0_i32_0 = arith.constant 0 : i32
    %c0_i32_1 = arith.constant 0 : i32
    return %c0_i32, %c0_i32_0 : i32, i32
  }
  func.func @transform_2(%arg0: i32) -> (i32, i32) {
    %c0_i32 = arith.constant 0 : i32
    %c0_i32_0 = arith.constant 0 : i32
    %c0_i32_1 = arith.constant 0 : i32
    return %c0_i32, %c0_i32_0 : i32, i32
  }
  func.func @transform_3(%arg0: i32) -> (i32, i32) {
    %c0_i32 = arith.constant 0 : i32
    %c0_i32_0 = arith.constant 0 : i32
    %c0_i32_1 = arith.constant 0 : i32
    return %c0_i32, %c0_i32_0 : i32, i32
  }
  func.func @transform_4(%arg0: i32) -> (i32, i32) {
    %c0_i32 = arith.constant 0 : i32
    %c0_i32_0 = arith.constant 0 : i32
    %c0_i32_1 = arith.constant 0 : i32
    return %c0_i32, %c0_i32_0 : i32, i32
  }
  func.func @transform_5(%arg0: i32) -> (i32, i32) {
    %c0_i32 = arith.constant 0 : i32
    %c0_i32_0 = arith.constant 0 : i32
    return %arg0, %c0_i32 : i32, i32
  }
}

</mosaic_0001>

<llo_original>
// kernel: tpu_custom_call.1
$region0: #{tpu_custom_call.1}
  #allocation0 [shape = 'u32[]', space=smem, size = 0x4, offset = 0x4, fixed_abs, tag = 'smem constant byte address 0x4 - core index']
  #allocation1 [shape = 'u32[144,128]{1,0:T(1,128)}', space=vmem, size = 0x12000, scoped, tag = 'internal scratch']
  %s0 = inlined_call_operand.hbm [shape: f32[16,128], index: 0, kind: input, shape index: {}]
  %s1 = inlined_call_operand.hbm [shape: bf16[128,128], index: 1, kind: input, shape index: {}]
  %s2 = inlined_call_operand.vmem [shape: f32[1,128], index: 2, kind: input, shape index: {}]
  %s3 = inlined_call_operand.hbm [shape: bf16[128,128], index: 3, kind: input, shape index: {}]
  %s4 = inlined_call_operand.vmem [shape: f32[1,128], index: 4, kind: input, shape index: {}]
  %s5 = inlined_call_operand.hbm [shape: f32[16,128], index: 5, kind: output, shape index: {}]
  %s6 = sld [smem:[#allocation0]]
  $region42: #{tpu_custom_call.1} parent=0
    _
  %s8 = ssub.s32 1, %s6
  %s9 = scalar_select 0, %s8, %s6
  $region1: #{tpu_custom_call.1} parent=0
    #allocation2 [shape = 'u8[8192]{0}', space=vmem, size = 0x2000, scoped, tag = 'input window, operand 0, single buffered']
    #allocation3 [shape = 's32[1]{0}', space=sflag, size = 0x4, scoped, tag = 'scoped memory for tpu_custom_call.1']
    #allocation4 [shape = 's32[1]{0}', space=sflag, size = 0x4, scoped, tag = 'scoped memory for tpu_custom_call.1']
    #allocation5 [shape = 'u8[32768]{0}', space=vmem, size = 0x8000, scoped, tag = 'input window, operand 1, single buffered']
    #allocation6 [shape = 's32[1]{0}', space=sflag, size = 0x4, scoped, tag = 'scoped memory for tpu_custom_call.1']
    #allocation7 [shape = 'u8[32768]{0}', space=vmem, size = 0x8000, scoped, tag = 'input window, operand 3, single buffered']
    #allocation8 [shape = 'u8[8192]{0}', space=vmem, size = 0x2000, scoped, tag = 'output window, operand 0, single buffered']
    %10 = vsyncpa [#allocation3], 0
    %11 = vsyncpa [#allocation6], 0
    %12 = vsyncpa [#allocation4], 0
    // Predicated region
    $region2: #{tpu_custom_call.1} parent=1 // pred_check
      _
    $region3: #{tpu_custom_call.1} parent=1 // pred_check_branch
      %14 = sbr.rel (0) target = $region5
    $region4: #{tpu_custom_call.1} parent=1 // pred_region
      %s16 = ssub.s32 256, 256
      %17 = vsyncadd [#allocation3], %s16
      %s18 = sshll.u32 [#allocation2], 4
      %s19 = int_to_ptr.vmem [resolvable:$true] %s18
      %24 = dma.hbm_to_vmem [thread:$0]  %s0, 256, %s19, [#allocation3], 128, 128, 8
    $region5: #{tpu_custom_call.1} parent=1 // pred_fallthru
      _
    // Predicated region
    $region6: #{tpu_custom_call.1} parent=1 // pred_check
      _
    $region7: #{tpu_custom_call.1} parent=1 // pred_check_branch
      %26 = sbr.rel (0) target = $region9
    $region8: #{tpu_custom_call.1} parent=1 // pred_region
      %s28 = ssub.s32 1024, 1024
      %29 = vsyncadd [#allocation6], %s28
      %s30 = sshll.u32 [#allocation5], 4
      %s31 = int_to_ptr.vmem [resolvable:$true] %s30
      %36 = dma.hbm_to_vmem [thread:$0]  %s1, 1024, %s31, [#allocation6], 64, 64, 4
    $region9: #{tpu_custom_call.1} parent=1 // pred_fallthru
      _
    // Predicated region
    $region10: #{tpu_custom_call.1} parent=1 // pred_check
      _
    $region11: #{tpu_custom_call.1} parent=1 // pred_check_branch
      %38 = sbr.rel (0) target = $region13
    $region12: #{tpu_custom_call.1} parent=1 // pred_region
      _
    $region13: #{tpu_custom_call.1} parent=1 // pred_fallthru
      _
    // Predicated region
    $region14: #{tpu_custom_call.1} parent=1 // pred_check
      _
    $region15: #{tpu_custom_call.1} parent=1 // pred_check_branch
      %40 = sbr.rel (0) target = $region17
    $region16: #{tpu_custom_call.1} parent=1 // pred_region
      %s42 = ssub.s32 1024, 1024
      %43 = vsyncadd [#allocation6], %s42
      %s44 = sshll.u32 [#allocation7], 4
      %s45 = int_to_ptr.vmem [resolvable:$true] %s44
      %50 = dma.hbm_to_vmem [thread:$0]  %s3, 1024, %s45, [#allocation6], 64, 64, 4
    $region17: #{tpu_custom_call.1} parent=1 // pred_fallthru
      _
    // Predicated region
    $region18: #{tpu_custom_call.1} parent=1 // pred_check
      _
    $region19: #{tpu_custom_call.1} parent=1 // pred_check_branch
      %52 = sbr.rel (0) target = $region21
    $region20: #{tpu_custom_call.1} parent=1 // pred_region
      _
    $region21: #{tpu_custom_call.1} parent=1 // pred_fallthru
      _
    // Predicated region
    $region22: #{tpu_custom_call.1} parent=1 // pred_check
      _
    $region23: #{tpu_custom_call.1} parent=1 // pred_check_branch
      %54 = sbr.rel (0) target = $region25
    $region24: #{tpu_custom_call.1} parent=1 // pred_region
      %55 = dma.done [#allocation3], 256
    $region25: #{tpu_custom_call.1} parent=1 // pred_fallthru
      _
    // Predicated region
    $region26: #{tpu_custom_call.1} parent=1 // pred_check
      _
    $region27: #{tpu_custom_call.1} parent=1 // pred_check_branch
      %57 = sbr.rel (0) target = $region29
    $region28: #{tpu_custom_call.1} parent=1 // pred_region
      %58 = dma.done [#allocation6], 1024
    $region29: #{tpu_custom_call.1} parent=1 // pred_fallthru
      _
    // Predicated region
    $region30: #{tpu_custom_call.1} parent=1 // pred_check
      _
    $region31: #{tpu_custom_call.1} parent=1 // pred_check_branch
      %60 = sbr.rel (0) target = $region33
    $region32: #{tpu_custom_call.1} parent=1 // pred_region
      %61 = dma.done [#allocation6], 1024
    $region33: #{tpu_custom_call.1} parent=1 // pred_fallthru
      _
    %v63 = vld [vmem:[#allocation2] sm:$0xff]
    %v64 = vld [vmem:[#allocation2 + $0x8] sm:$0xff]
    %v65 = vpack.c.bf16 %v64, %v63
    %v66 = vld [vmem:[#allocation5] sm:$0xf]
    %v67 = vld [vmem:[#allocation5 + $0x4] sm:$0xf]
    %v68 = vld [vmem:[#allocation5 + $0x8] sm:$0xf]
    %v69 = vld [vmem:[#allocation5 + $0xc] sm:$0xf]
    %v70 = vld [vmem:[#allocation5 + $0x10] sm:$0xf]
    %v71 = vld [vmem:[#allocation5 + $0x14] sm:$0xf]
    %v72 = vld [vmem:[#allocation5 + $0x18] sm:$0xf]
    %v73 = vld [vmem:[#allocation5 + $0x1c] sm:$0xf]
    %v74 = vld [vmem:[#allocation5 + $0x20] sm:$0xf]
    %v75 = vld [vmem:[#allocation5 + $0x24] sm:$0xf]
    %v76 = vld [vmem:[#allocation5 + $0x28] sm:$0xf]
    %v77 = vld [vmem:[#allocation5 + $0x2c] sm:$0xf]
    %v78 = vld [vmem:[#allocation5 + $0x30] sm:$0xf]
    %v79 = vld [vmem:[#allocation5 + $0x34] sm:$0xf]
    %v80 = vld [vmem:[#allocation5 + $0x38] sm:$0xf]
    %v81 = vld [vmem:[#allocation5 + $0x3c] sm:$0xf]
    %v82 = vld [vmem:[%s2] sm:$0x1]
    %v84 = vlaneseq
    %v85 = vshrl.u32 %v84, 7
    %v86 = vsub.s32 0, %v85
    %v87 = vrot.slane %v82, %v86
    %v105 = vunpack.c.l.b16 %v66
    %v106 = vunpack.c.l.b16 %v67
    %v107 = vunpack.c.l.b16 %v68
    %v108 = vunpack.c.l.b16 %v69
    %v109 = vunpack.c.l.b16 %v70
    %v110 = vunpack.c.l.b16 %v71
    %v111 = vunpack.c.l.b16 %v72
    %v112 = vunpack.c.l.b16 %v73
    %v113 = vunpack.c.l.b16 %v74
    %v114 = vunpack.c.l.b16 %v75
    %v115 = vunpack.c.l.b16 %v76
    %v116 = vunpack.c.l.b16 %v77
    %v117 = vunpack.c.l.b16 %v78
    %v118 = vunpack.c.l.b16 %v79
    %v119 = vunpack.c.l.b16 %v80
    %v120 = vunpack.c.l.b16 %v81
    %v121 = vpack.c.b16 %v106, %v105
    %v122 = vpack.c.b16 %v108, %v107
    %v123 = vpack.c.b16 %v110, %v109
    %v124 = vpack.c.b16 %v112, %v111
    %v125 = vpack.c.b16 %v114, %v113
    %v126 = vpack.c.b16 %v116, %v115
    %v127 = vpack.c.b16 %v118, %v117
    %v128 = vpack.c.b16 %v120, %v119
    %137 = vmatprep.subr.bf16.mxu0 0
    %138 = vmatpush1.bf16.msra.mxu0 %v128
    %139 = vmatprep.subr.bf16.mxu0 0
    %140 = vmatpush1.bf16.msra.mxu0 %v127
    %141 = vmatprep.subr.bf16.mxu0 0
    %142 = vmatpush1.bf16.msra.mxu0 %v126
    %143 = vmatprep.subr.bf16.mxu0 0
    %144 = vmatpush1.bf16.msra.mxu0 %v125
    %145 = vmatprep.subr.bf16.mxu0 0
    %146 = vmatpush1.bf16.msra.mxu0 %v124
    %147 = vmatprep.subr.bf16.mxu0 0
    %148 = vmatpush1.bf16.msra.mxu0 %v123
    %149 = vmatprep.subr.bf16.mxu0 0
    %150 = vmatpush1.bf16.msra.mxu0 %v122
    %151 = vmatprep.subr.bf16.mxu0 0
    %152 = vmatpush1.bf16.msra.mxu0 %v121
    %153 = vmatprep.subr.bf16.mxu0 0
    %154 = vmatpush2.bf16.msra.mxu0 0
    %155 = vmatprep.subr.bf16.mxu0 0
    %156 = vmatpush2.bf16.msra.mxu0 0
    %157 = vmatprep.subr.bf16.mxu0 0
    %158 = vmatpush2.bf16.msra.mxu0 0
    %159 = vmatprep.subr.bf16.mxu0 0
    %160 = vmatpush2.bf16.msra.mxu0 0
    %161 = vmatprep.subr.bf16.mxu0 0
    %162 = vmatpush2.bf16.msra.mxu0 0
    %163 = vmatprep.subr.bf16.mxu0 0
    %164 = vmatpush2.bf16.msra.mxu0 0
    %165 = vmatprep.subr.bf16.mxu0 0
    %166 = vmatpush2.bf16.msra.mxu0 0
    %167 = vmatprep.subr.bf16.mxu0 0
    %168 = vmatpush2.bf16.msra.mxu0 0
    %169 = vmatprep.mubr.bf16.mxu0 0
    %170 = vmatmul.mubr.bf16.gmra.mxu0 %v65
    %v171 = vpop.f32.mrf.mxu0
    %v172 = vadd.f32 %v87, %v171
    %v173 = vpop.f32.mrf.mxu0
    %v174 = vpop.f32.mrf.mxu0
    %v175 = vadd.f32 %v87, %v174
    %v176 = vpop.f32.mrf.mxu0
    %177 = vdwg.mxu0
    %v178 = vmul.f32 %v172, %v172
    %v179 = vmul.f32 %v175, %v175
    %v180 = vmul.f32 %v178, %v172
    %v181 = vmul.f32 %v179, %v175
    %v182 = vmul.f32 %v180, 0.044715
    %v183 = vmul.f32 %v181, 0.044715
    %v184 = vadd.f32 %v172, %v182
    %v185 = vadd.f32 %v175, %v183
    %v186 = vmul.f32 %v184, 0.7978846
    %v187 = vmul.f32 %v185, 0.7978846
    %v188 = vtanh.pop %v186
    %v189 = vtanh.pop %v187
    %v190 = vadd.f32 %v188, 1.0
    %v191 = vadd.f32 %v189, 1.0
    %v192 = vmul.f32 %v172, %v190
    %v193 = vmul.f32 %v175, %v191
    %v194 = vpack.c.bf16 %v193, %v192
    %v195 = vld [vmem:[#allocation7] sm:$0xf]
    %v196 = vld [vmem:[#allocation7 + $0x4] sm:$0xf]
    %v197 = vld [vmem:[#allocation7 + $0x8] sm:$0xf]
    %v198 = vld [vmem:[#allocation7 + $0xc] sm:$0xf]
    %v199 = vld [vmem:[#allocation7 + $0x10] sm:$0xf]
    %v200 = vld [vmem:[#allocation7 + $0x14] sm:$0xf]
    %v201 = vld [vmem:[#allocation7 + $0x18] sm:$0xf]
    %v202 = vld [vmem:[#allocation7 + $0x1c] sm:$0xf]
    %v203 = vld [vmem:[#allocation7 + $0x20] sm:$0xf]
    %v204 = vld [vmem:[#allocation7 + $0x24] sm:$0xf]
    %v205 = vld [vmem:[#allocation7 + $0x28] sm:$0xf]
    %v206 = vld [vmem:[#allocation7 + $0x2c] sm:$0xf]
    %v207 = vld [vmem:[#allocation7 + $0x30] sm:$0xf]
    %v208 = vld [vmem:[#allocation7 + $0x34] sm:$0xf]
    %v209 = vld [vmem:[#allocation7 + $0x38] sm:$0xf]
    %v210 = vld [vmem:[#allocation7 + $0x3c] sm:$0xf]
    %v211 = vld [vmem:[%s4] sm:$0x1]
    %v213 = vlaneseq
    %v214 = vshrl.u32 %v213, 7
    %v215 = vsub.s32 0, %v214
    %v216 = vrot.slane %v211, %v215
    %v234 = vunpack.c.l.b16 %v195
    %v235 = vunpack.c.l.b16 %v196
    %v236 = vunpack.c.l.b16 %v197
    %v237 = vunpack.c.l.b16 %v198
    %v238 = vunpack.c.l.b16 %v199
    %v239 = vunpack.c.l.b16 %v200
    %v240 = vunpack.c.l.b16 %v201
    %v241 = vunpack.c.l.b16 %v202
    %v242 = vunpack.c.l.b16 %v203
    %v243 = vunpack.c.l.b16 %v204
    %v244 = vunpack.c.l.b16 %v205
    %v245 = vunpack.c.l.b16 %v206
    %v246 = vunpack.c.l.b16 %v207
    %v247 = vunpack.c.l.b16 %v208
    %v248 = vunpack.c.l.b16 %v209
    %v249 = vunpack.c.l.b16 %v210
    %v250 = vpack.c.b16 %v235, %v234
    %v251 = vpack.c.b16 %v237, %v236
    %v252 = vpack.c.b16 %v239, %v238
    %v253 = vpack.c.b16 %v241, %v240
    %v254 = vpack.c.b16 %v243, %v242
    %v255 = vpack.c.b16 %v245, %v244
    %v256 = vpack.c.b16 %v247, %v246
    %v257 = vpack.c.b16 %v249, %v248
    %266 = vmatprep.subr.bf16.mxu0 0
    %267 = vmatpush1.bf16.msra.mxu0 %v257
    %268 = vmatprep.subr.bf16.mxu0 0
    %269 = vmatpush1.bf16.msra.mxu0 %v256
    %270 = vmatprep.subr.bf16.mxu0 0
    %271 = vmatpush1.bf16.msra.mxu0 %v255
    %272 = vmatprep.subr.bf16.mxu0 0
    %273 = vmatpush1.bf16.msra.mxu0 %v254
    %274 = vmatprep.subr.bf16.mxu0 0
    %275 = vmatpush1.bf16.msra.mxu0 %v253
    %276 = vmatprep.subr.bf16.mxu0 0
    %277 = vmatpush1.bf16.msra.mxu0 %v252
    %278 = vmatprep.subr.bf16.mxu0 0
    %279 = vmatpush1.bf16.msra.mxu0 %v251
    %280 = vmatprep.subr.bf16.mxu0 0
    %281 = vmatpush1.bf16.msra.mxu0 %v250
    %282 = vmatprep.subr.bf16.mxu0 0
    %283 = vmatpush2.bf16.msra.mxu0 0
    %284 = vmatprep.subr.bf16.mxu0 0
    %285 = vmatpush2.bf16.msra.mxu0 0
    %286 = vmatprep.subr.bf16.mxu0 0
    %287 = vmatpush2.bf16.msra.mxu0 0
    %288 = vmatprep.subr.bf16.mxu0 0
    %289 = vmatpush2.bf16.msra.mxu0 0
    %290 = vmatprep.subr.bf16.mxu0 0
    %291 = vmatpush2.bf16.msra.mxu0 0
    %292 = vmatprep.subr.bf16.mxu0 0
    %293 = vmatpush2.bf16.msra.mxu0 0
    %294 = vmatprep.subr.bf16.mxu0 0
    %295 = vmatpush2.bf16.msra.mxu0 0
    %296 = vmatprep.subr.bf16.mxu0 0
    %297 = vmatpush2.bf16.msra.mxu0 0
    %298 = vmatprep.mubr.bf16.mxu0 0
    %299 = vmatmul.mubr.bf16.gmra.mxu0 %v194
    %v300 = vpop.f32.mrf.mxu0
    %v301 = vadd.f32 %v216, %v300
    %v302 = vpop.f32.mrf.mxu0
    %v303 = vpop.f32.mrf.mxu0
    %v304 = vadd.f32 %v216, %v303
    %v305 = vpop.f32.mrf.mxu0
    %306 = vdwg.mxu0
    %v307 = vadd.f32 %v63, %v301
    %v308 = vadd.f32 %v64, %v304
    %309 = vst [vmem:[#allocation8] sm:$0xff] %v307
    %310 = vst [vmem:[#allocation8 + $0x8] sm:$0xff] %v308
    // Predicated region
    $region34: #{tpu_custom_call.1} parent=1 // pred_check
      _
    $region35: #{tpu_custom_call.1} parent=1 // pred_check_branch
      %312 = sbr.rel (0) target = $region37
    $region36: #{tpu_custom_call.1} parent=1 // pred_region
      %s314 = ssub.s32 256, 256
      %315 = vsyncadd [#allocation4], %s314
      %s316 = sshll.u32 [#allocation8], 4
      %s317 = int_to_ptr.vmem [resolvable:$true] %s316
      %322 = dma.vmem_to_hbm [thread:$0]  %s317, 256, %s5, [#allocation4], 128, 128, 8
    $region37: #{tpu_custom_call.1} parent=1 // pred_fallthru
      _
    // Predicated region
    $region38: #{tpu_custom_call.1} parent=1 // pred_check
      _
    $region39: #{tpu_custom_call.1} parent=1 // pred_check_branch
      %324 = sbr.rel (0) target = $region41
    $region40: #{tpu_custom_call.1} parent=1 // pred_region
      %325 = dma.done [#allocation4], 256
    $region41: #{tpu_custom_call.1} parent=1 // pred_fallthru
      _
    %326 = vsyncpa [#allocation3], 1
    %327 = vsyncpa [#allocation6], 1
    %328 = vsyncpa [#allocation4], 1

</llo_original>
